<compile_context>
chip_gen: v7x
topology: tpu7x:2x2x1
jax: 0.10.0
libtpu: 0.0.40
codegen_flags: <defaults>
</compile_context>

<pallas_src>
import functools

import jax
import jax.numpy as jnp
from jax.experimental import pallas as pl
from jax.experimental.pallas import tpu as pltpu


def _kd_loss_kernel(pred_ref, know_ref, out_ref, acc_ref, *,
                    inv_t, hw, tile_hw, n_hw, tiles_per_core,
                    needs_mask, needs_skip):
    s = pl.program_id(1)          # core-split index (parallel)
    j = pl.program_id(2)          # spatial-tile index within this core (reduction)
    tile_idx = s * tiles_per_core + j

    @pl.when(j == 0)
    def _():
        acc_ref[...] = jnp.zeros_like(acc_ref)

    def _accumulate():
        # (C, tile_hw): channel on sublanes, spatial on lanes.
        p = pred_ref[0].astype(jnp.float32) * inv_t
        k = know_ref[0].astype(jnp.float32) * inv_t

        # log_softmax(pred/T) pieces.
        p_max = jnp.max(p, axis=0, keepdims=True)
        p_shift = p - p_max
        lse_p = jnp.log(jnp.sum(jnp.exp(p_shift), axis=0, keepdims=True))

        # softmax(know/T) pieces.
        k_max = jnp.max(k, axis=0, keepdims=True)
        k_shift = k - k_max
        k_exp = jnp.exp(k_shift)
        k_sum = jnp.sum(k_exp, axis=0, keepdims=True)

        # Fused KL per spatial column (sum over channels):
        #   sum_c q*(log q - log p)
        # = (1/k_sum) * sum_c k_exp*(k_shift - p_shift) + (lse_p - log k_sum)
        num = jnp.sum(k_exp * (k_shift - p_shift), axis=0, keepdims=True)
        kl_col = num * pl.reciprocal(k_sum, approx=False) + (lse_p - jnp.log(k_sum))

        if needs_mask:
            # Only the globally-last spatial tile has a ragged tail.
            @pl.when(tile_idx == n_hw - 1)
            def _():
                col = (jax.lax.broadcasted_iota(jnp.int32, (1, tile_hw), 1)
                       + tile_idx * tile_hw)
                # Keep the select (not a multiply): padded columns may hold
                # inf/NaN garbage and must be discarded, not scaled.
                acc_ref[...] += jnp.where(col < hw, kl_col, 0.0)

            @pl.when(tile_idx != n_hw - 1)
            def _():
                acc_ref[...] += kl_col
        else:
            acc_ref[...] += kl_col

    if needs_skip:
        # Core-split with odd tile count: the duplicated (clamped) tile on the
        # second core must contribute nothing.
        pl.when(tile_idx < n_hw)(_accumulate)
    else:
        _accumulate()

    # Collapse to a scalar only once, at the last reduction step of this core.
    @pl.when(j == tiles_per_core - 1)
    def _():
        out_ref[...] = jnp.sum(acc_ref[...]).reshape(1, 1, 1)


def knowledge_loss(pred, know, T, *, max_block_bytes=6 * 1024 * 1024):
    """pred, know: NCHW float arrays. Returns the scalar distillation loss."""
    B, C, H, W = pred.shape
    assert know.shape == pred.shape
    HW = H * W
    itemsize = jnp.dtype(pred.dtype).itemsize

    # Pure reshape (no transpose / HBM copy): NCHW -> (B, C, H*W).
    pred3 = pred.reshape(B, C, HW)
    know3 = know.reshape(B, C, HW)

    # ---- Generation-aware scoped-VMEM budget --------------------------------
    # v5e/v6e: 128 MiB physical -> raise the scoped limit to 64 MiB.
    # v7x:      64 MiB physical -> cap around ~45 MiB.
    try:
        info = pltpu.get_tpu_info()
        vmem_cap = int(getattr(info, "vmem_capacity_bytes", 64 * 1024 * 1024))
    except Exception:
        vmem_cap = 64 * 1024 * 1024
    vmem_limit = min(64 * 1024 * 1024, int(vmem_cap * 0.7))

    # ---- Spatial (lane) tile size -------------------------------------------
    # Per-lane VMEM bill: 2 inputs x 2 pipeline buffers (input dtype) plus ~6
    # full-tile f32 elementwise temporaries kept live inside the kernel.
    c_pad = ((C + 7) // 8) * 8
    per_lane_bytes = 2 * 2 * c_pad * itemsize + 6 * c_pad * 4
    usable = vmem_limit - (2 << 20)          # headroom for accumulator / misc

    full_block_bytes = c_pad * HW * itemsize
    if HW * per_lane_bytes <= usable and full_block_bytes <= max_block_bytes:
        tile_hw = HW                         # one full-width tile per batch
    else:
        tile_budget = (usable // per_lane_bytes) // 128 * 128
        tile_cap = (max_block_bytes // (c_pad * itemsize)) // 128 * 128
        tile_hw = min(tile_budget, tile_cap)
        if tile_hw < 128:
            # TODO(synk): very large C needs a channel-chunked / online-LSE path.
            raise NotImplementedError("channel dim too large for one VMEM block")
        if tile_hw >= HW:
            tile_hw = HW
        else:
            # Prefer a tile that divides HW (drops the tail mask entirely) as
            # long as it stays lane-dense (>= 512) or >= half the optimum.
            for cand in range(tile_hw, 0, -128):
                if HW % cand == 0 and (cand >= 512 or 2 * cand >= tile_hw):
                    tile_hw = cand
                    break
    n_hw = pl.cdiv(HW, tile_hw)

    # ---- Core split: give both v7x TensorCores work when B == 1 -------------
    ncore = 2 if (B == 1 and n_hw >= 2) else 1
    tiles_per_core = pl.cdiv(n_hw, ncore)
    needs_mask = (HW % tile_hw) != 0
    needs_skip = (ncore * tiles_per_core) != n_hw

    if needs_skip:
        def in_idx(b, s, j):
            # Clamp so the DMA stays in bounds; the kernel skips the duplicate.
            return (b, 0, jnp.minimum(s * tiles_per_core + j, n_hw - 1))
    else:
        def in_idx(b, s, j):
            return (b, 0, s * tiles_per_core + j)

    kernel = functools.partial(
        _kd_loss_kernel, inv_t=1.0 / float(T), hw=HW, tile_hw=tile_hw,
        n_hw=n_hw, tiles_per_core=tiles_per_core,
        needs_mask=needs_mask, needs_skip=needs_skip)

    # Clearly memory-bound custom call: hint XLA's scheduler.
    cost = pl.CostEstimate(
        flops=12 * B * C * HW,
        transcendentals=2 * B * C * HW,
        bytes_accessed=2 * B * C * HW * itemsize,
    )

    partials = pl.pallas_call(
        kernel,
        out_shape=jax.ShapeDtypeStruct((B, ncore, 1), jnp.float32),
        grid_spec=pltpu.PrefetchScalarGridSpec(
            num_scalar_prefetch=0,
            grid=(B, ncore, tiles_per_core),
            in_specs=[
                pl.BlockSpec((1, C, tile_hw), in_idx),
                pl.BlockSpec((1, C, tile_hw), in_idx),
            ],
            out_specs=pl.BlockSpec((1, 1, 1), lambda b, s, j: (b, s, 0)),
            scratch_shapes=[pltpu.VMEM((1, tile_hw), jnp.float32)],
        ),
        compiler_params=pltpu.CompilerParams(
            dimension_semantics=("parallel", "parallel", "arbitrary"),
            vmem_limit_bytes=vmem_limit,
        ),
        cost_estimate=cost,
    )(pred3, know3)

    # Final scaling (glue): sum per-batch/per-core partials, * T^2 / (B * H * W).
    return jnp.sum(partials) * (float(T) ** 2) / (B * HW)


def _reference(pred, know, T):
    """Pure-JAX reference mirroring the PyTorch module."""
    log_pred = jax.nn.log_softmax(pred / T, axis=1)
    q = jax.nn.softmax(know / T, axis=1)
    kl = jnp.sum(q * (jnp.log(q) - log_pred))
    return kl * (T ** 2) / (pred.shape[0] * pred.shape[2] * pred.shape[3])


if __name__ == "__main__":
    T = 3.0
    key = jax.random.PRNGKey(0)
    k1, k2 = jax.random.split(key)

    # Main case (module-typical small shape).
    pred = jax.random.normal(k1, (2, 4, 16, 16), dtype=jnp.float32)
    know = jax.random.normal(k2, (2, 4, 16, 16), dtype=jnp.float32)
    out = jax.block_until_ready(knowledge_loss(pred, know, T))
    ref = _reference(pred, know, T)
    assert jnp.allclose(out, ref, rtol=1e-5, atol=1e-5), (out, ref)

    # Exercise the multi-tile / ragged-tail / core-split / skip paths by
    # forcing a tiny per-block cap (same kernel, different tiling decisions).
    for shape, cap in [((1, 5, 13, 17), 4096),   # ragged tail mask, 2-way split
                       ((1, 4, 32, 32), 4096),   # 8 tiles, 2-way split, no mask
                       ((1, 4, 16, 24), 4096)]:  # 3 tiles, clamp + skip path
        ka, kb = jax.random.split(jax.random.fold_in(key, cap + shape[2] * shape[3]))
        p = jax.random.normal(ka, shape, dtype=jnp.float32)
        q = jax.random.normal(kb, shape, dtype=jnp.float32)
        o = jax.block_until_ready(knowledge_loss(p, q, T, max_block_bytes=cap))
        r = _reference(p, q, T)
        assert jnp.allclose(o, r, rtol=1e-5, atol=1e-5), (shape, o, r)

    print("KERNEL_OK")
</pallas_src>

<mosaic_0001>
module attributes {stable_mosaic.version = 11 : i64} {
  func.func @_kd_loss_kernel(%arg0: i32, %arg1: i32, %arg2: i32, %arg3: memref<1x4x256xf32, #tpu.memory_space<vmem>>, %arg4: memref<1x4x256xf32, #tpu.memory_space<vmem>>, %arg5: memref<1x1x1xf32, #tpu.memory_space<vmem>>, %arg6: memref<1x256xf32, #tpu.memory_space<vmem>>) attributes {dimension_semantics = [#tpu.dimension_semantics<parallel>, #tpu.dimension_semantics<parallel>, #tpu.dimension_semantics<arbitrary>], iteration_bounds = array<i64: 2, 1, 1>, scalar_prefetch = 0 : i64, scratch_operands = 1 : i64, tpu.core_type = #tpu.core_type<tc>, window_params = [{transform_indices = @transform_0, window_bounds = array<i64: 1, 4, 256>}, {transform_indices = @transform_1, window_bounds = array<i64: 1, 4, 256>}, {transform_indices = @transform_2, window_bounds = array<i64: 1, 1, 1>}]} {
    %c0_i32 = arith.constant 0 : i32
    %0 = arith.cmpi eq, %arg2, %c0_i32 : i32
    %1 = arith.extui %0 : i1 to i32
    %c0_i32_0 = arith.constant 0 : i32
    %2 = arith.cmpi ne, %1, %c0_i32_0 : i32
    scf.if %2 {
      %cst_18 = arith.constant 0.000000e+00 : f32
      %41 = vector.broadcast %cst_18 : f32 to vector<1x256xf32>
      %c0_19 = arith.constant 0 : index
      %c0_20 = arith.constant 0 : index
      %42 = vector.load %arg6[%c0_19, %c0_20] : memref<1x256xf32, #tpu.memory_space<vmem>>, vector<1x256xf32>
      tpu.vector_store %arg6[%c0_19, %c0_20], %41 {strides = array<i32>} : memref<1x256xf32, #tpu.memory_space<vmem>>, vector<1x256xf32>,
    } else {
    }
    %c0 = arith.constant 0 : index
    %c0_1 = arith.constant 0 : index
    %c0_2 = arith.constant 0 : index
    %3 = vector.load %arg3[%c0, %c0_1, %c0_2] : memref<1x4x256xf32, #tpu.memory_space<vmem>>, vector<1x4x256xf32>
    %4 = vector.shape_cast %3 : vector<1x4x256xf32> to vector<4x256xf32>
    %cst = arith.constant 0.333333343 : f32
    %5 = vector.broadcast %cst : f32 to vector<4x256xf32>
    %6 = arith.mulf %4, %5 : vector<4x256xf32>
    %c0_3 = arith.constant 0 : index
    %c0_4 = arith.constant 0 : index
    %c0_5 = arith.constant 0 : index
    %7 = vector.load %arg4[%c0_3, %c0_4, %c0_5] : memref<1x4x256xf32, #tpu.memory_space<vmem>>, vector<1x4x256xf32>
    %8 = vector.shape_cast %7 : vector<1x4x256xf32> to vector<4x256xf32>
    %cst_6 = arith.constant 0.333333343 : f32
    %9 = vector.broadcast %cst_6 : f32 to vector<4x256xf32>
    %10 = arith.mulf %8, %9 : vector<4x256xf32>
    %cst_7 = arith.constant dense<0xFF800000> : vector<256xf32>
    %11 = vector.multi_reduction <maximumf>, %6, %cst_7 [0] : vector<4x256xf32> to vector<256xf32>
    %12 = vector.shape_cast %11 : vector<256xf32> to vector<1x256xf32>
    %13 = vector.broadcast %12 : vector<1x256xf32> to vector<4x256xf32>
    %14 = arith.subf %6, %13 : vector<4x256xf32>
    %15 = math.exp %14 : vector<4x256xf32>
    %cst_8 = arith.constant dense<0.000000e+00> : vector<256xf32>
    %16 = vector.multi_reduction <add>, %15, %cst_8 [0] : vector<4x256xf32> to vector<256xf32>
    %17 = vector.shape_cast %16 : vector<256xf32> to vector<1x256xf32>
    %18 = math.log %17 : vector<1x256xf32>
    %cst_9 = arith.constant dense<0xFF800000> : vector<256xf32>
    %19 = vector.multi_reduction <maximumf>, %10, %cst_9 [0] : vector<4x256xf32> to vector<256xf32>
    %20 = vector.shape_cast %19 : vector<256xf32> to vector<1x256xf32>
    %21 = vector.broadcast %20 : vector<1x256xf32> to vector<4x256xf32>
    %22 = arith.subf %10, %21 : vector<4x256xf32>
    %23 = math.exp %22 : vector<4x256xf32>
    %cst_10 = arith.constant dense<0.000000e+00> : vector<256xf32>
    %24 = vector.multi_reduction <add>, %23, %cst_10 [0] : vector<4x256xf32> to vector<256xf32>
    %25 = vector.shape_cast %24 : vector<256xf32> to vector<1x256xf32>
    %26 = arith.subf %22, %14 : vector<4x256xf32>
    %27 = arith.mulf %23, %26 : vector<4x256xf32>
    %cst_11 = arith.constant dense<0.000000e+00> : vector<256xf32>
    %28 = vector.multi_reduction <add>, %27, %cst_11 [0] : vector<4x256xf32> to vector<256xf32>
    %29 = vector.shape_cast %28 : vector<256xf32> to vector<1x256xf32>
    %30 = tpu.reciprocal %25 : vector<1x256xf32> -> vector<1x256xf32>
    %31 = arith.mulf %29, %30 : vector<1x256xf32>
    %32 = math.log %25 : vector<1x256xf32>
    %33 = arith.subf %18, %32 : vector<1x256xf32>
    %34 = arith.addf %31, %33 : vector<1x256xf32>
    %c0_12 = arith.constant 0 : index
    %c0_13 = arith.constant 0 : index
    %35 = vector.load %arg6[%c0_12, %c0_13] : memref<1x256xf32, #tpu.memory_space<vmem>>, vector<1x256xf32>
    %36 = arith.addf %35, %34 : vector<1x256xf32>
    %c0_14 = arith.constant 0 : index
    %c0_15 = arith.constant 0 : index
    %37 = vector.load %arg6[%c0_14, %c0_15] : memref<1x256xf32, #tpu.memory_space<vmem>>, vector<1x256xf32>
    tpu.vector_store %arg6[%c0_14, %c0_15], %36 {strides = array<i32>} : memref<1x256xf32, #tpu.memory_space<vmem>>, vector<1x256xf32>,
    %c0_i32_16 = arith.constant 0 : i32
    %38 = arith.cmpi eq, %arg2, %c0_i32_16 : i32
    %39 = arith.extui %38 : i1 to i32
    %c0_i32_17 = arith.constant 0 : i32
    %40 = arith.cmpi ne, %39, %c0_i32_17 : i32
    scf.if %40 {
      %c0_18 = arith.constant 0 : index
      %c0_19 = arith.constant 0 : index
      %41 = vector.load %arg6[%c0_18, %c0_19] : memref<1x256xf32, #tpu.memory_space<vmem>>, vector<1x256xf32>
      %42 = vector.shape_cast %41 : vector<1x256xf32> to vector<1x1x256xf32>
      %cst_20 = arith.constant dense<0.000000e+00> : vector<1xf32>
      %43 = vector.multi_reduction <add>, %42, %cst_20 [1, 2] : vector<1x1x256xf32> to vector<1xf32>
      %44 = vector.shape_cast %43 : vector<1xf32> to vector<1x1x1xf32>
      %45 = vector.extract %44[0, 0, 0] : f32 from vector<1x1x1xf32>
      %46 = vector.broadcast %45 : f32 to vector<1x1x1xf32>
      %c0_21 = arith.constant 0 : index
      %c0_22 = arith.constant 0 : index
      %c0_23 = arith.constant 0 : index
      %47 = vector.load %arg5[%c0_21, %c0_22, %c0_23] : memref<1x1x1xf32, #tpu.memory_space<vmem>>, vector<1x1x1xf32>
      tpu.vector_store %arg5[%c0_21, %c0_22, %c0_23], %46 {strides = array<i32>} : memref<1x1x1xf32, #tpu.memory_space<vmem>>, vector<1x1x1xf32>,
    } else {
    }
    return
  }
  func.func @transform_0(%arg0: i32, %arg1: i32, %arg2: i32) -> (i32, i32, i32) {
    %c1_i32 = arith.constant 1 : i32
    %0 = arith.muli %arg1, %c1_i32 : i32
    %1 = arith.addi %0, %arg2 : i32
    %c0_i32 = arith.constant 0 : i32
    %c0_i32_0 = arith.constant 0 : i32
    return %arg0, %c0_i32, %1 : i32, i32, i32
  }
  func.func @transform_1(%arg0: i32, %arg1: i32, %arg2: i32) -> (i32, i32, i32) {
    %c1_i32 = arith.constant 1 : i32
    %0 = arith.muli %arg1, %c1_i32 : i32
    %1 = arith.addi %0, %arg2 : i32
    %c0_i32 = arith.constant 0 : i32
    %c0_i32_0 = arith.constant 0 : i32
    return %arg0, %c0_i32, %1 : i32, i32, i32
  }
  func.func @transform_2(%arg0: i32, %arg1: i32, %arg2: i32) -> (i32, i32, i32) {
    %c0_i32 = arith.constant 0 : i32
    %c0_i32_0 = arith.constant 0 : i32
    return %arg0, %arg1, %c0_i32 : i32, i32, i32
  }
}

</mosaic_0001>

<llo_original>
// kernel: tpu_custom_call.1
$region0: #{tpu_custom_call.1}
  #allocation0 [shape = 'u32[]', space=smem, size = 0x4, offset = 0x4, fixed_abs, tag = 'smem constant byte address 0x4 - core index']
  #allocation1 [shape = 'u32[144,128]{1,0:T(1,128)}', space=vmem, size = 0x12000, scoped, tag = 'internal scratch']
  #allocation2 [shape = 'f32[1,256]{1,0:T(1,128)}', space=vmem, size = 0x400, scoped, tag = 'scratch operand']
  %s0 = inlined_call_operand.hbm [shape: f32[2,4,256], index: 0, kind: input, shape index: {}]
  %s1 = inlined_call_operand.hbm [shape: f32[2,4,256], index: 1, kind: input, shape index: {}]
  %s2 = inlined_call_operand.vmem [shape: f32[2,1,1], index: 2, kind: output, shape index: {}]
  %s3 = sld [smem:[#allocation0]]
  $region57: #{tpu_custom_call.1} parent=0
    _
  %s5 = ssub.s32 1, %s3
  %s6 = scalar_select 0, %s5, %s3
  $region1: #{tpu_custom_call.1} parent=0
    #allocation3 [shape = 'u8[8192]{0}', space=vmem, size = 0x2000, scoped, tag = 'input window, operand 0']
    #allocation4 [shape = 's32[2]{0}', space=sflag, size = 0x8, scoped, tag = 'scoped memory for tpu_custom_call.1']
    #allocation5 [shape = 'u8[8192]{0}', space=vmem, size = 0x2000, scoped, tag = 'input window, operand 1']
    #allocation6 [shape = 's32[2]{0}', space=sflag, size = 0x8, scoped, tag = 'scoped memory for tpu_custom_call.1']
    %7 = vsyncpa [#allocation4], 0
    %s8 = scalar_lea.sflag [#allocation4], 1
    %9 = vsyncpa %s8, 0
    %10 = vsyncpa [#allocation6], 0
    %s11 = scalar_lea.sflag [#allocation6], 1
    %12 = vsyncpa %s11, 0
    loop: start=0, step=1, limit=4
    $region2: #{tpu_custom_call.1} parent=1 // loop_pre_header
      _
    $region3: #{tpu_custom_call.1} parent=1 // loop_header
      %s14 = sphi 0, %s18
      %p15 = scmp.ge.s32.totalorder %s14, 4
      %s21 = sphi 0, %s40
      %s22 = sphi 0, %s36
      %s23 = sphi 0, %s32
      %s24 = sphi 0, %s21
      %s25 = sphi 0, %s22
      %s26 = sphi 0, %s23
      %s27 = sphi 0, %s24
      %s28 = sphi 0, %s25
      %s29 = sphi 0, %s26
      %s47 = sphi 0, %s49
      %s50 = sphi 0, %s47
      %s51 = sphi 0, %s50
      %s67 = sphi 0, %s51
      %s77 = sphi 0, %s79
      %s80 = sphi 0, %s77
      %s81 = sphi 0, %s80
      %s97 = sphi 0, %s81
      %s105 = sphi 0, %s107
      %s108 = sphi 0, %s105
      %s109 = sphi 0, %s108
      %s125 = sphi 0, %s109
    $region4: #{tpu_custom_call.1} parent=1 // loop_header_branch
      %17 = sbr.rel (%p15) target = $region8
    $region5: #{tpu_custom_call.1} parent=1 // loop_body
      %s19 = ssub.s32 %s14, 1
      %s20 = ssub.s32 %s14, 2
      %s30 = sadd.s32 1, %s23
      %p31 = scmp.ge.s32.totalorder %s30, 1
      %s32 = scalar_select %p31, 0, %s30
      %s33 = sadd.s32 1, %s22
      %s34 = scalar_select %p31, %s33, %s22
      %p35 = scmp.ge.s32.totalorder %s34, 1
      %s36 = scalar_select %p35, 0, %s34
      %s37 = sadd.s32 1, %s21
      %s38 = scalar_select %p35, %s37, %s21
      %p39 = scmp.ge.s32.totalorder %s38, 2
      %s40 = scalar_select %p39, 0, %s38
      %s41 = sadd.s32 %s22, %s23
      %s42 = sadd.s32 %s36, %s32
      %s43 = ssub.s32 %s21, %s40
      %s44 = ssub.s32 %s41, %s42
      %s45 = sor.u32 %s43, %s44
      %p46 = scmp.eq.s32.totalorder %s45, 0
      %s48 = sadd.s32 %s47, 1
      %s49 = scalar_select %p46, %s47, %s48
      %p52 = pneg %p46
      %p53 = scmp.eq.s32.totalorder %s14, 1
      %p54 = por %p52, %p53
      %p55 = scmp.ne.s32.totalorder %s47, %s50
      %p56 = scmp.eq.s32.totalorder %s14, 0
      %p57 = por %p55, %p56
      %p58 = scmp.ne.s32.totalorder %s47, %s50
      %p59 = scmp.eq.s32.totalorder %s19, 1
      %p60 = por %p58, %p59
      %p61 = scmp.ne.s32.totalorder %s50, %s51
      %p62 = scmp.eq.s32.totalorder %s19, 0
      %p63 = por %p61, %p62
      %p64 = scmp.ne.s32.totalorder %s50, %s51
      %p65 = scmp.eq.s32.totalorder %s20, 1
      %p66 = por %p64, %p65
      %p68 = scmp.ne.s32.totalorder %s51, %s67
      %p69 = scmp.eq.s32.totalorder %s20, 0
      %p70 = por %p68, %p69
      %s71 = sadd.s32 %s22, %s23
      %s72 = sadd.s32 %s36, %s32
      %s73 = ssub.s32 %s21, %s40
      %s74 = ssub.s32 %s71, %s72
      %s75 = sor.u32 %s73, %s74
      %p76 = scmp.eq.s32.totalorder %s75, 0
      %s78 = sadd.s32 %s77, 1
      %s79 = scalar_select %p76, %s77, %s78
      %p82 = pneg %p76
      %p83 = scmp.eq.s32.totalorder %s14, 1
      %p84 = por %p82, %p83
      %p85 = scmp.ne.s32.totalorder %s77, %s80
      %p86 = scmp.eq.s32.totalorder %s14, 0
      %p87 = por %p85, %p86
      %p88 = scmp.ne.s32.totalorder %s77, %s80
      %p89 = scmp.eq.s32.totalorder %s19, 1
      %p90 = por %p88, %p89
      %p91 = scmp.ne.s32.totalorder %s80, %s81
      %p92 = scmp.eq.s32.totalorder %s19, 0
      %p93 = por %p91, %p92
      %p94 = scmp.ne.s32.totalorder %s80, %s81
      %p95 = scmp.eq.s32.totalorder %s20, 1
      %p96 = por %p94, %p95
      %p98 = scmp.ne.s32.totalorder %s81, %s97
      %p99 = scmp.eq.s32.totalorder %s20, 0
      %p100 = por %p98, %p99
      %s101 = ssub.s32 %s21, %s40
      %s102 = ssub.s32 %s22, %s36
      %s103 = sor.u32 %s101, %s102
      %p104 = scmp.eq.s32.totalorder %s103, 0
      %s106 = sadd.s32 %s105, 1
      %s107 = scalar_select %p104, %s105, %s106
      %p110 = pneg %p104
      %p111 = scmp.eq.s32.totalorder %s14, 1
      %p112 = por %p110, %p111
      %p113 = scmp.ne.s32.totalorder %s105, %s108
      %p114 = scmp.eq.s32.totalorder %s14, 0
      %p115 = por %p113, %p114
      %p116 = scmp.ne.s32.totalorder %s105, %s108
      %p117 = scmp.eq.s32.totalorder %s19, 1
      %p118 = por %p116, %p117
      %p119 = scmp.ne.s32.totalorder %s108, %s109
      %p120 = scmp.eq.s32.totalorder %s19, 0
      %p121 = por %p119, %p120
      %p122 = scmp.ne.s32.totalorder %s108, %s109
      %p123 = scmp.eq.s32.totalorder %s20, 1
      %p124 = por %p122, %p123
      %p126 = scmp.ne.s32.totalorder %s109, %s125
      %p127 = scmp.eq.s32.totalorder %s20, 0
      %p128 = por %p126, %p127
      %p129 = scmp.le.s32.totalorder 1, %s14
      %p130 = scmp.lt.s32.totalorder %s14, 3
      %p131 = pnand %p129, %p130
      %p132 = pneg %p131
      // Predicated region
      $region9: #{tpu_custom_call.1} parent=5 // pred_check
        _
      $region10: #{tpu_custom_call.1} parent=5 // pred_check_branch
        %134 = sbr.rel (%p131) target = $region12
      $region11: #{tpu_custom_call.1} parent=5 // pred_region
        %s135 = ssub.s32 %s14, 1
      $region12: #{tpu_custom_call.1} parent=5 // pred_fallthru
        _
      %p136 = scmp.lt.s32.totalorder %s14, 2
      // Predicated region
      $region13: #{tpu_custom_call.1} parent=5 // pred_check
        %p137 = pneg %p136
      $region14: #{tpu_custom_call.1} parent=5 // pred_check_branch
        %139 = sbr.rel (%p137) target = $region16
      $region15: #{tpu_custom_call.1} parent=5 // pred_region
        // Predicated region
        $region17: #{tpu_custom_call.1} parent=15 // pred_check
          %p140 = pneg %p57
        $region18: #{tpu_custom_call.1} parent=15 // pred_check_branch
          %142 = sbr.rel (%p140) target = $region20
        $region19: #{tpu_custom_call.1} parent=15 // pred_region
          %s143 = sand.u32 %s47, 1
          %s144 = scalar_lea.sflag [#allocation4], %s143
          %s145 = sand.u32 %s47, 1
          %s146 = smul.addr %s145, 8
          %s147 = scalar_lea.vmem [#allocation3], %s146
          %s148 = sadd.s32 %s22, %s23
          %s149 = smul.u32 2, %s148
          %s151 = ssub.s32 128, 128
          %152 = vsyncadd %s144, %s151
          %s153 = smul.addr %s21, 2
          %s154 = sadd.s32 %s149, %s153
          %s155 = smul.addr %s154, 64
          %s156 = scalar_lea.hbm %s0, %s155
          %s158 = sshll.u32 %s147, 4
          %s159 = int_to_ptr.vmem [resolvable:$true] %s158
          %161 = dma.hbm_to_vmem [thread:$0]  %s156, 128, %s159, %s144
        $region20: #{tpu_custom_call.1} parent=15 // pred_fallthru
          _
        // Predicated region
        $region21: #{tpu_custom_call.1} parent=15 // pred_check
          %p162 = pneg %p87
        $region22: #{tpu_custom_call.1} parent=15 // pred_check_branch
          %164 = sbr.rel (%p162) target = $region24
        $region23: #{tpu_custom_call.1} parent=15 // pred_region
          %s165 = sand.u32 %s77, 1
          %s166 = scalar_lea.sflag [#allocation6], %s165
          %s167 = sand.u32 %s77, 1
          %s168 = smul.addr %s167, 8
          %s169 = scalar_lea.vmem [#allocation5], %s168
          %s170 = sadd.s32 %s22, %s23
          %s171 = smul.u32 2, %s170
          %s173 = ssub.s32 128, 128
          %174 = vsyncadd %s166, %s173
          %s175 = smul.addr %s21, 2
          %s176 = sadd.s32 %s171, %s175
          %s177 = smul.addr %s176, 64
          %s178 = scalar_lea.hbm %s1, %s177
          %s180 = sshll.u32 %s169, 4
          %s181 = int_to_ptr.vmem [resolvable:$true] %s180
          %183 = dma.hbm_to_vmem [thread:$0]  %s178, 128, %s181, %s166
        $region24: #{tpu_custom_call.1} parent=15 // pred_fallthru
          _
      $region16: #{tpu_custom_call.1} parent=5 // pred_fallthru
        _
      %p184 = scmp.le.s32.totalorder 1, %s14
      %p185 = scmp.lt.s32.totalorder %s14, 3
      %p186 = pnand %p184, %p185
      %p187 = pneg %p186
      // Predicated region
      $region25: #{tpu_custom_call.1} parent=5 // pred_check
        _
      $region26: #{tpu_custom_call.1} parent=5 // pred_check_branch
        %189 = sbr.rel (%p186) target = $region28
      $region27: #{tpu_custom_call.1} parent=5 // pred_region
        %s190 = ssub.s32 %s14, 1
        %s191 = sand.u32 %s50, 1
        %s192 = scalar_lea.sflag [#allocation4], %s191
        %s193 = sand.u32 %s50, 1
        %s194 = smul.addr %s193, 8
        %s195 = scalar_lea.vmem [#allocation3], %s194
        // Predicated region
        $region29: #{tpu_custom_call.1} parent=27 // pred_check
          %p196 = pneg %p63
        $region30: #{tpu_custom_call.1} parent=27 // pred_check_branch
          %198 = sbr.rel (%p196) target = $region32
        $region31: #{tpu_custom_call.1} parent=27 // pred_region
          %199 = dma.done %s192, 128
        $region32: #{tpu_custom_call.1} parent=27 // pred_fallthru
          _
        %s200 = sand.u32 %s80, 1
        %s201 = scalar_lea.sflag [#allocation6], %s200
        %s202 = sand.u32 %s80, 1
        %s203 = smul.addr %s202, 8
        %s204 = scalar_lea.vmem [#allocation5], %s203
        // Predicated region
        $region33: #{tpu_custom_call.1} parent=27 // pred_check
          %p205 = pneg %p93
        $region34: #{tpu_custom_call.1} parent=27 // pred_check_branch
          %207 = sbr.rel (%p205) target = $region36
        $region35: #{tpu_custom_call.1} parent=27 // pred_region
          %208 = dma.done %s201, 128
        $region36: #{tpu_custom_call.1} parent=27 // pred_fallthru
          _
        %s209 = sand.u32 %s50, 1
        %s210 = scalar_lea.sflag [#allocation4], %s209
        %s211 = sand.u32 %s50, 1
        %s212 = smul.addr %s211, 8
        %s213 = scalar_lea.vmem [#allocation3], %s212
        %p214 = pneg %p63
        %p215 = pneg %p60
        %s216 = sand.u32 %s80, 1
        %s217 = scalar_lea.sflag [#allocation6], %s216
        %s218 = sand.u32 %s80, 1
        %s219 = smul.addr %s218, 8
        %s220 = scalar_lea.vmem [#allocation5], %s219
        %p221 = pneg %p93
        %p222 = pneg %p90
        %p223 = pneg %p121
        %p224 = pneg %p118
        %p225 = scmp.lt.s32.totalorder %s24, 1
        %s226 = scalar_select %p225, %s24, 1
        %p227 = scmp.lt.s32.totalorder %s25, 0
        %s228 = scalar_select %p227, %s25, 0
        %s229 = sadd.s32 %s228, %s226
        %s230 = scalar_lea.vmem %s2, %s229
        %s231 = sadd.s32 %s25, %s26
        %s232 = smul.u32 2, %s231
        %s233 = sadd.s32 %s25, %s26
        %s234 = smul.u32 2, %s233
        %p235 = scmp.lt.s32.totalorder %s24, 1
        %s236 = scalar_select %p235, %s24, 1
        %p237 = scmp.lt.s32.totalorder %s25, 0
        %s238 = scalar_select %p237, %s25, 0
        %s239 = sadd.s32 %s238, %s236
        %s240 = scalar_lea.vmem %s2, %s239
        %p241 = scmp.eq.s32.totalorder %s26, 0
        // Predicated region
        $region37: #{tpu_custom_call.1} parent=27 // pred_check
          %p242 = pneg %p241
        $region38: #{tpu_custom_call.1} parent=27 // pred_check_branch
          %244 = sbr.rel (%p242) target = $region40
        $region39: #{tpu_custom_call.1} parent=27 // pred_region
          %v245 = vlaneseq
          %vm246 = vcmp.ge.s32.totalorder %v245, 0
          %vm247 = vcmp.lt.s32.totalorder %v245, 256
          %vm248 = vmand %vm246, %vm247
          %249 = vst.msk [vmem:[#allocation2] sm:$0x3] %vm248, 0.0
        $region40: #{tpu_custom_call.1} parent=27 // pred_fallthru
          _
        %v250 = vld [vmem:[%s195] sm:$0xff]
        %v251 = vmul.f32 %v250, 0.33333334
        %v252 = vld [vmem:[%s204] sm:$0xff]
        %v253 = vmul.f32 %v252, 0.33333334
        %v255 = vcombine.high %v251, %v251
        %vm257 = vcmask 1043456
        %v258 = vsel %vm257, %v251, -inf
        %v259 = vrot.slane %v258, 4
        %v260 = vmax.f32 %v258, %v259
        %v261 = vrot.slane %v260, 2
        %v262 = vmax.f32 %v260, %v261
        %v263 = vrot.slane %v262, 1
        %v264 = vmax.f32 %v262, %v263
        %v265 = vsel %vm257, %v255, -inf
        %v266 = vrot.slane %v265, 4
        %v267 = vmax.f32 %v265, %v266
        %v268 = vrot.slane %v267, 2
        %v269 = vmax.f32 %v267, %v268
        %v270 = vrot.slane %v269, 1
        %v271 = vmax.f32 %v269, %v270
        %v274 = vcombine.low %v264, %v271
        %v276 = vsub.f32 %v251, %v274
        %v277 = vmul.f32 %v276, 1.442695
        %v278 = vpow.pop %v277
        %v280 = vcombine.high %v278, %v278
        %v282 = vsel %vm257, %v278, 0.0
        %v283 = vrot.slane %v282, 4
        %v284 = vadd.f32 %v282, %v283
        %v285 = vrot.slane %v284, 2
        %v286 = vadd.f32 %v284, %v285
        %v287 = vrot.slane %v286, 1
        %v288 = vadd.f32 %v286, %v287
        %v289 = vsel %vm257, %v280, 0.0
        %v290 = vrot.slane %v289, 4
        %v291 = vadd.f32 %v289, %v290
        %v292 = vrot.slane %v291, 2
        %v293 = vadd.f32 %v291, %v292
        %v294 = vrot.slane %v293, 1
        %v295 = vadd.f32 %v293, %v294
        %v296 = vlog2.pop %v288
        %v297 = vmul.f32 %v296, 0.6931472
        %v298 = vlog2.pop %v295
        %v299 = vmul.f32 %v298, 0.6931472
        %v301 = vcombine.high %v253, %v253
        %v303 = vsel %vm257, %v253, -inf
        %v304 = vrot.slane %v303, 4
        %v305 = vmax.f32 %v303, %v304
        %v306 = vrot.slane %v305, 2
        %v307 = vmax.f32 %v305, %v306
        %v308 = vrot.slane %v307, 1
        %v309 = vmax.f32 %v307, %v308
        %v310 = vsel %vm257, %v301, -inf
        %v311 = vrot.slane %v310, 4
        %v312 = vmax.f32 %v310, %v311
        %v313 = vrot.slane %v312, 2
        %v314 = vmax.f32 %v312, %v313
        %v315 = vrot.slane %v314, 1
        %v316 = vmax.f32 %v314, %v315
        %v319 = vcombine.low %v309, %v316
        %v321 = vsub.f32 %v253, %v319
        %v322 = vmul.f32 %v321, 1.442695
        %v323 = vpow.pop %v322
        %v325 = vcombine.high %v323, %v323
        %v327 = vsel %vm257, %v323, 0.0
        %v328 = vrot.slane %v327, 4
        %v329 = vadd.f32 %v327, %v328
        %v330 = vrot.slane %v329, 2
        %v331 = vadd.f32 %v329, %v330
        %v332 = vrot.slane %v331, 1
        %v333 = vadd.f32 %v331, %v332
        %v334 = vsel %vm257, %v325, 0.0
        %v335 = vrot.slane %v334, 4
        %v336 = vadd.f32 %v334, %v335
        %v337 = vrot.slane %v336, 2
        %v338 = vadd.f32 %v336, %v337
        %v339 = vrot.slane %v338, 1
        %v340 = vadd.f32 %v338, %v339
        %v341 = vsub.f32 %v321, %v276
        %v342 = vmul.f32 %v323, %v341
        %v344 = vcombine.high %v342, %v342
        %v346 = vsel %vm257, %v342, 0.0
        %v347 = vrot.slane %v346, 4
        %v348 = vadd.f32 %v346, %v347
        %v349 = vrot.slane %v348, 2
        %v350 = vadd.f32 %v348, %v349
        %v351 = vrot.slane %v350, 1
        %v352 = vadd.f32 %v350, %v351
        %v353 = vsel %vm257, %v344, 0.0
        %v354 = vrot.slane %v353, 4
        %v355 = vadd.f32 %v353, %v354
        %v356 = vrot.slane %v355, 2
        %v357 = vadd.f32 %v355, %v356
        %v358 = vrot.slane %v357, 1
        %v359 = vadd.f32 %v357, %v358
        %v360 = vrcp.pop %v333
        %v361 = vrcp.pop %v340
        %v362 = vmul.f32 %v352, %v360
        %v363 = vmul.f32 %v359, %v361
        %v364 = vlog2.pop %v333
        %v365 = vmul.f32 %v364, 0.6931472
        %v366 = vlog2.pop %v340
        %v367 = vmul.f32 %v366, 0.6931472
        %v368 = vsub.f32 %v297, %v365
        %v369 = vsub.f32 %v299, %v367
        %v370 = vadd.f32 %v362, %v368
        %v371 = vadd.f32 %v363, %v369
        %v372 = vld [vmem:[#allocation2] sm:$0x3]
        %v375 = vcombine.low %v370, %v371
        %v377 = vunpack.c.l.s4 1966171168
        %v378 = vunpack.c.0.s8 %v377
        %v379 = vlaneseq
        %v380 = vshrl.u32 %v379, 7
        %v381 = vsub.s32 %v378, %v380
        %v382 = vrot.slane %v375, %v381
        %v384 = vunpack.c.l.s4 1966171168
        %v385 = vunpack.c.0.s8 %v384
        %v386 = vlaneseq
        %v387 = vshrl.u32 %v386, 7
        %v388 = vsub.s32 %v385, %v387
        %v389 = vrot.slane %v382, %v388
        %v391 = vadd.f32 %v372, %v389
        %v392 = vlaneseq
        %vm393 = vcmp.ge.s32.totalorder %v392, 0
        %vm394 = vcmp.lt.s32.totalorder %v392, 256
        %vm395 = vmand %vm393, %vm394
        %396 = vst.msk [vmem:[#allocation2] sm:$0x3] %vm395, %v391
        // Predicated region
        $region41: #{tpu_custom_call.1} parent=27 // pred_check
          %p397 = pneg %p241
        $region42: #{tpu_custom_call.1} parent=27 // pred_check_branch
          %399 = sbr.rel (%p397) target = $region44
        $region43: #{tpu_custom_call.1} parent=27 // pred_region
          %v400 = vld [vmem:[#allocation2] sm:$0x3]
          %v402 = vlaneseq
          %v403 = vshrl.u32 %v402, 7
          %v404 = vsub.s32 0, %v403
          %v405 = vrot.slane %v400, %v404
          %v406 = vlaneseq
          %v407 = vshrl.u32 %v406, 7
          %v408 = vsub.s32 1, %v407
          %v409 = vrot.slane %v400, %v408
          %vm412 = vcmask 1040384
          %v413 = vsel %vm412, %v405, 0.0
          %v414 = vsel %vm412, %v409, 0.0
          %v415 = vadd.f32 %v413, %v414
          %416 = vadd.xlane.f32.xlu0 %v415
          %v417 = vpop.xlane.xlu0 %416
          %v418 = vrot.slane %v417, 4
          %v419 = vadd.f32 %v417, %v418
          %v420 = vrot.slane %v419, 2
          %v421 = vadd.f32 %v419, %v420
          %v422 = vrot.slane %v421, 1
          %v423 = vadd.f32 %v421, %v422
          %s424 = vtos %v423
          %v425 = vstv %s424
          %vm426 = vcmask 0
          %427 = vst.msk [vmem:[%s240] sm:$0x1] %vm426, %v425
        $region44: #{tpu_custom_call.1} parent=27 // pred_fallthru
          _
        %p428 = scmp.lt.s32.totalorder %s24, 1
        %s429 = scalar_select %p428, %s24, 1
        %p430 = scmp.lt.s32.totalorder %s25, 0
        %s431 = scalar_select %p430, %s25, 0
        %s432 = sadd.s32 %s431, %s429
        %s433 = scalar_lea.vmem %s2, %s432
        // Predicated region
        $region45: #{tpu_custom_call.1} parent=27 // pred_check
          %p434 = pneg %p118
        $region46: #{tpu_custom_call.1} parent=27 // pred_check_branch
          %436 = sbr.rel (%p434) target = $region48
        $region47: #{tpu_custom_call.1} parent=27 // pred_region
          _
        $region48: #{tpu_custom_call.1} parent=27 // pred_fallthru
          _
      $region28: #{tpu_custom_call.1} parent=5 // pred_fallthru
        _
      %p437 = scmp.le.s32.totalorder 2, %s14
      // Predicated region
      $region49: #{tpu_custom_call.1} parent=5 // pred_check
        %p438 = pneg %p437
      $region50: #{tpu_custom_call.1} parent=5 // pred_check_branch
        %440 = sbr.rel (%p438) target = $region52
      $region51: #{tpu_custom_call.1} parent=5 // pred_region
        %s441 = ssub.s32 %s14, 2
        // Predicated region
        $region53: #{tpu_custom_call.1} parent=51 // pred_check
          %p442 = pneg %p124
        $region54: #{tpu_custom_call.1} parent=51 // pred_check_branch
          %444 = sbr.rel (%p442) target = $region56
        $region55: #{tpu_custom_call.1} parent=51 // pred_region
          %p445 = scmp.lt.s32.totalorder %s27, 1
          %s446 = scalar_select %p445, %s27, 1
          %p447 = scmp.lt.s32.totalorder %s28, 0
          %s448 = scalar_select %p447, %s28, 0
          %s449 = sadd.s32 %s448, %s446
          %s450 = scalar_lea.vmem %s2, %s449
        $region56: #{tpu_custom_call.1} parent=51 // pred_fallthru
          _
      $region52: #{tpu_custom_call.1} parent=5 // pred_fallthru
        _
    $region6: #{tpu_custom_call.1} parent=1 // loop_footer
      %s18 = sadd.s32 1, %s14
    $region7: #{tpu_custom_call.1} parent=1 // loop_footer_branch
      %13 = sbr.rel target = $region3
    $region8: #{tpu_custom_call.1} parent=1 // loop_exit
      _
    %451 = vsyncpa [#allocation4], 1
    %s452 = scalar_lea.sflag [#allocation4], 1
    %453 = vsyncpa %s452, 1
    %454 = vsyncpa [#allocation6], 1
    %s455 = scalar_lea.sflag [#allocation6], 1
    %456 = vsyncpa %s455, 1

</llo_original>
